<compile_context>
chip_gen: v5e
topology: v5e:2x2
jax: 0.10.0
libtpu: 0.0.40
codegen_flags: <defaults>
</compile_context>

<pallas_src>
import jax
import jax.numpy as jnp
from jax import lax
from jax.experimental import pallas as pl
from jax.experimental.pallas import tpu as pltpu

_MiB = 1024 * 1024
# Conservative per-call VMEM budget used to clamp the batch tile (fits even
# v5e's 16 MiB default scoped VMEM).
_VMEM_BUDGET_BYTES = 16 * _MiB
# Explicit scoped-VMEM cap for Mosaic; safe on all generations (v7x physical
# VMEM is 64 MiB per TensorCore).
_VMEM_LIMIT_BYTES = 32 * _MiB


def _tm_target() -> int:
    """Generation-aware batch-tile target (rows)."""
    try:
        vmem_cap = int(pltpu.get_tpu_info().vmem_capacity_bytes)
    except Exception:  # non-TPU trace / older API: assume 128 MiB class
        vmem_cap = 128 * _MiB
    # v7x (64 MiB VMEM, 2 TCs): smaller tiles so the "parallel" batch axis has
    # >=2 steps at moderate B.  v5e/v6e (128 MiB): 1024-row tiles amortize the
    # ~0.35us per-grid-step overhead.
    return 256 if vmem_cap <= 64 * _MiB else 1024


def _pick_tile(B: int, D_in: int, D_out: int) -> int:
    tm = _tm_target()
    if B <= tm:
        # Single full-batch tile: full-extent dims are always legal block dims,
        # so no padding is needed even if B is not a multiple of 8.
        return B
    # Clamp TM so 2x(x tile) + 2x(out tile) + 2x(weight + bias) fit the budget.
    resident = 4 * 2 * (D_out * D_in + D_out)  # weight + bias, double-buffered
    per_row = 4 * 2 * (D_in + D_out)           # one x row + one out row, x2 buffers
    tm_cap = (_VMEM_BUDGET_BYTES - resident) // per_row
    tm_cap = max(8, (tm_cap // 8) * 8)         # sublane-aligned
    return min(tm, tm_cap)


def adaline_kernel(x_ref, w_ref, b_ref, o_ref):
    # x_ref: (TM, D_in)       activations tile
    # w_ref: (D_out, D_in)    weight in PyTorch layout (transpose folded into dot)
    # b_ref: (1, D_out)       bias
    # o_ref: (TM, D_out)      output tile (no lane padding)
    acc = lax.dot_general(
        x_ref[...], w_ref[...],
        dimension_numbers=(((1,), (1,)), ((), ())),  # contract K of x with K of W
        preferred_element_type=jnp.float32,
    )
    o_ref[...] = (acc + b_ref[...]).astype(o_ref.dtype)  # f32 epilogue (v5e-safe)


def adaline_forward(x, weight, bias):
    """Pallas implementation of nn.Linear forward: x @ weight.T + bias.

    Args:
      x:      (batch, input_size) float32
      weight: (output_size, input_size) float32 (PyTorch layout, NOT pre-transposed)
      bias:   (output_size,) float32
    Returns:
      (batch, output_size) float32
    """
    B, D_in = x.shape
    D_out, D_in_w = weight.shape
    assert D_in_w == D_in, "weight/input size mismatch"

    tm = _pick_tile(B, D_in, D_out)
    grid = (pl.cdiv(B, tm),)  # ragged last batch block is masked by Pallas
    bias2d = bias.reshape(1, D_out)  # metadata-only reshape, no HBM pass

    return pl.pallas_call(
        adaline_kernel,
        out_shape=jax.ShapeDtypeStruct((B, D_out), x.dtype),
        grid_spec=pl.GridSpec(
            grid=grid,
            in_specs=[
                pl.BlockSpec((tm, D_in), lambda i: (i, 0)),      # stream batch tiles
                pl.BlockSpec((D_out, D_in), lambda i: (0, 0)),   # weight: VMEM-resident
                pl.BlockSpec((1, D_out), lambda i: (0, 0)),      # bias:   VMEM-resident
            ],
            out_specs=pl.BlockSpec((tm, D_out), lambda i: (i, 0)),
        ),
        compiler_params=pltpu.CompilerParams(
            dimension_semantics=("parallel",),       # batch axis shardable across TCs
            vmem_limit_bytes=_VMEM_LIMIT_BYTES,
        ),
        cost_estimate=pl.CostEstimate(
            flops=2 * B * D_in * D_out,
            transcendentals=0,
            bytes_accessed=4 * (B * D_in + D_out * D_in + D_out + B * D_out),
        ),
    )(x, weight, bias2d)


if __name__ == "__main__":
    key = jax.random.PRNGKey(0)
    k_x, k_w = jax.random.split(key)

    batch = 8
    input_size = 32
    output_size = 4

    # Deterministic parameter init mirroring ADALINE._initialize_weights:
    # weight ~ N(0, 0.1), bias = 0.
    weight = 0.1 * jax.random.normal(k_w, (output_size, input_size), dtype=jnp.float32)
    bias = jnp.zeros((output_size,), dtype=jnp.float32)

    x = jax.random.normal(k_x, (batch, input_size), dtype=jnp.float32)

    out = jax.block_until_ready(adaline_forward(x, weight, bias))

    # Reference check against plain JAX linear.
    ref = x @ weight.T + bias
    assert out.shape == (batch, output_size)
    assert jnp.allclose(out, ref, atol=1e-5, rtol=1e-5)

    # TODO(synk): fit()/predict() (Delta-Rule training loop, sign thresholding)
    # are host-side training utilities, not part of the forward hot path.
    print("KERNEL_OK")
</pallas_src>

<mosaic_0001>
module attributes {stable_mosaic.version = 11 : i64} {
  func.func @adaline_kernel(%arg0: i32, %arg1: memref<8x32xf32, #tpu.memory_space<vmem>>, %arg2: memref<4x32xf32, #tpu.memory_space<vmem>>, %arg3: memref<1x4xf32, #tpu.memory_space<vmem>>, %arg4: memref<8x4xf32, #tpu.memory_space<vmem>>) attributes {dimension_semantics = [#tpu.dimension_semantics<parallel>], iteration_bounds = array<i64: 1>, scalar_prefetch = 0 : i64, scratch_operands = 0 : i64, tpu.core_type = #tpu.core_type<tc>, window_params = [{transform_indices = @transform_0, window_bounds = array<i64: 8, 32>}, {pipeline_mode = #tpu.pipeline_mode<synchronous>, transform_indices = @transform_1, window_bounds = array<i64: 4, 32>}, {pipeline_mode = #tpu.pipeline_mode<synchronous>, transform_indices = @transform_2, window_bounds = array<i64: 1, 4>}, {transform_indices = @transform_3, window_bounds = array<i64: 8, 4>}]} {
    %c0 = arith.constant 0 : index
    %c0_0 = arith.constant 0 : index
    %0 = vector.load %arg1[%c0, %c0_0] : memref<8x32xf32, #tpu.memory_space<vmem>>, vector<8x32xf32>
    %c0_1 = arith.constant 0 : index
    %c0_2 = arith.constant 0 : index
    %1 = vector.load %arg2[%c0_1, %c0_2] : memref<4x32xf32, #tpu.memory_space<vmem>>, vector<4x32xf32>
    %cst = arith.constant dense<0.000000e+00> : vector<8x4xf32>
    %2 = tpu.matmul %0, %1, %cst {dimension_numbers = #tpu.dot_dimension_numbers<[1], [1], [0], [0], [0, 0, 1, 0], [], []>} : vector<8x32xf32>, vector<4x32xf32>, vector<8x4xf32> -> vector<8x4xf32>
    %c0_3 = arith.constant 0 : index
    %c0_4 = arith.constant 0 : index
    %3 = vector.load %arg3[%c0_3, %c0_4] : memref<1x4xf32, #tpu.memory_space<vmem>>, vector<1x4xf32>
    %4 = vector.broadcast %3 : vector<1x4xf32> to vector<8x4xf32>
    %5 = arith.addf %2, %4 : vector<8x4xf32>
    %c0_5 = arith.constant 0 : index
    %c0_6 = arith.constant 0 : index
    %6 = vector.load %arg4[%c0_5, %c0_6] : memref<8x4xf32, #tpu.memory_space<vmem>>, vector<8x4xf32>
    tpu.vector_store %arg4[%c0_5, %c0_6], %5 {strides = array<i32>} : memref<8x4xf32, #tpu.memory_space<vmem>>, vector<8x4xf32>,
    return
  }
  func.func @transform_0(%arg0: i32) -> (i32, i32) {
    %c0_i32 = arith.constant 0 : i32
    %c0_i32_0 = arith.constant 0 : i32
    return %arg0, %c0_i32 : i32, i32
  }
  func.func @transform_1(%arg0: i32) -> (i32, i32) {
    %c0_i32 = arith.constant 0 : i32
    %c0_i32_0 = arith.constant 0 : i32
    %c0_i32_1 = arith.constant 0 : i32
    return %c0_i32, %c0_i32_0 : i32, i32
  }
  func.func @transform_2(%arg0: i32) -> (i32, i32) {
    %c0_i32 = arith.constant 0 : i32
    %c0_i32_0 = arith.constant 0 : i32
    %c0_i32_1 = arith.constant 0 : i32
    return %c0_i32, %c0_i32_0 : i32, i32
  }
  func.func @transform_3(%arg0: i32) -> (i32, i32) {
    %c0_i32 = arith.constant 0 : i32
    %c0_i32_0 = arith.constant 0 : i32
    return %arg0, %c0_i32 : i32, i32
  }
}

</mosaic_0001>

<llo_original>
// kernel: tpu_custom_call.1
$region0: #{tpu_custom_call.1}
  #allocation0 [shape = 'u32[]', space=smem, size = 0x4, offset = 0x4, fixed_abs, tag = 'smem constant byte address 0x4 - core index']
  #allocation1 [shape = 'u32[72,128]{1,0:T(1,128)}', space=vmem, size = 0x9000, scoped, tag = 'internal scratch']
  %s0 = inlined_call_operand.hbm [shape: f32[8,32], index: 0, kind: input, shape index: {}]
  %s1 = inlined_call_operand.hbm [shape: f32[4,32], index: 1, kind: input, shape index: {}]
  %s2 = inlined_call_operand.vmem [shape: f32[1,4], index: 2, kind: input, shape index: {}]
  %s3 = inlined_call_operand.vmem [shape: f32[8,4], index: 3, kind: output, shape index: {}]
  %s4 = sld [smem:[#allocation0]]
  $region30: #{tpu_custom_call.1} parent=0
    _
  %s6 = ssub.s32 1, %s4
  %s7 = scalar_select 0, %s6, %s4
  $region1: #{tpu_custom_call.1} parent=0
    #allocation2 [shape = 'u8[4096]{0}', space=vmem, size = 0x1000, scoped, tag = 'input window, operand 0, single buffered']
    #allocation3 [shape = 's32[1]{0}', space=sflag, size = 0x4, scoped, tag = 'scoped memory for tpu_custom_call.1']
    #allocation4 [shape = 'u8[2048]{0}', space=vmem, size = 0x800, scoped, tag = 'input window, operand 1, single buffered']
    #allocation5 [shape = 's32[1]{0}', space=sflag, size = 0x4, scoped, tag = 'scoped memory for tpu_custom_call.1']
    %8 = vsyncpa [#allocation3], 0
    %9 = vsyncpa [#allocation5], 0
    // Predicated region
    $region2: #{tpu_custom_call.1} parent=1 // pred_check
      _
    $region3: #{tpu_custom_call.1} parent=1 // pred_check_branch
      %11 = sbr.rel (0) target = $region5
    $region4: #{tpu_custom_call.1} parent=1 // pred_region
      %13 = vsyncadd [#allocation3], 0
      %s15 = sshll.u32 %s0, 4
      %s16 = int_to_ptr.hbm [resolvable:$true] %s15
      %s17 = sshll.u32 [#allocation2], 4
      %s18 = int_to_ptr.vmem [resolvable:$true] %s17
      %20 = dma.hbm_to_vmem [thread:$0]  %s16, 128, %s18, [#allocation3]
    $region5: #{tpu_custom_call.1} parent=1 // pred_fallthru
      _
    // Predicated region
    $region6: #{tpu_custom_call.1} parent=1 // pred_check
      _
    $region7: #{tpu_custom_call.1} parent=1 // pred_check_branch
      %22 = sbr.rel (0) target = $region9
    $region8: #{tpu_custom_call.1} parent=1 // pred_region
      %24 = vsyncadd [#allocation5], 0
      %s26 = sshll.u32 %s1, 4
      %s27 = int_to_ptr.hbm [resolvable:$true] %s26
      %s28 = sshll.u32 [#allocation4], 4
      %s29 = int_to_ptr.vmem [resolvable:$true] %s28
      %31 = dma.hbm_to_vmem [thread:$0]  %s27, 64, %s29, [#allocation5]
    $region9: #{tpu_custom_call.1} parent=1 // pred_fallthru
      _
    // Predicated region
    $region10: #{tpu_custom_call.1} parent=1 // pred_check
      _
    $region11: #{tpu_custom_call.1} parent=1 // pred_check_branch
      %33 = sbr.rel (0) target = $region13
    $region12: #{tpu_custom_call.1} parent=1 // pred_region
      _
    $region13: #{tpu_custom_call.1} parent=1 // pred_fallthru
      _
    // Predicated region
    $region14: #{tpu_custom_call.1} parent=1 // pred_check
      _
    $region15: #{tpu_custom_call.1} parent=1 // pred_check_branch
      %35 = sbr.rel (0) target = $region17
    $region16: #{tpu_custom_call.1} parent=1 // pred_region
      %37 = dma.done [#allocation3], 128
    $region17: #{tpu_custom_call.1} parent=1 // pred_fallthru
      _
    // Predicated region
    $region18: #{tpu_custom_call.1} parent=1 // pred_check
      _
    $region19: #{tpu_custom_call.1} parent=1 // pred_check_branch
      %39 = sbr.rel (0) target = $region21
    $region20: #{tpu_custom_call.1} parent=1 // pred_region
      %41 = dma.done [#allocation5], 64
    $region21: #{tpu_custom_call.1} parent=1 // pred_fallthru
      _
    %v42 = vld [vmem:[#allocation2] sm:$0xff]
    %v43 = vld [vmem:[#allocation4] sm:$0xf]
    %v44 = vld [vmem:[%s2] sm:$0x1]
    %v46 = vperm.slane %v44, 0
    %vm48 = vcmask 261120
    %v50 = vsel %vm48, %v42, 0
    %v53 = vsel %vm48, %v43, 0
    %55 = vmatpush.xpose.msra.mxu0 0.0
    %56 = vmatpush.xpose.msra.mxu0 0.0
    %57 = vmatpush.xpose.msra.mxu0 0.0
    %58 = vmatpush.xpose.msra.mxu0 0.0
    %59 = vmatpush.xpose.msra.mxu0 0.0
    %60 = vmatpush.xpose.msra.mxu0 0.0
    %61 = vmatpush.xpose.msra.mxu0 0.0
    %62 = vmatpush.xpose.msra.mxu0 0.0
    %63 = vmatpush.xpose.msra.mxu0 0.0
    %64 = vmatpush.xpose.msra.mxu0 0.0
    %65 = vmatpush.xpose.msra.mxu0 0.0
    %66 = vmatpush.xpose.msra.mxu0 0.0
    %67 = vmatpush.xpose.msra.mxu0 0.0
    %68 = vmatpush.xpose.msra.mxu0 0.0
    %69 = vmatpush.xpose.msra.mxu0 0.0
    %70 = vmatpush.xpose.msra.mxu0 %v53
    %71 = vmatmul.f32.gmra.mxu0 %v50
    %v72 = vpop.f32.mrf.mxu0
    %v73 = vadd.f32 %v46, %v72
    %74 = vdwg.mxu0
    %vm75 = vcmask 31744
    %76 = vst.msk [vmem:[%s3] sm:$0xff] %vm75, %v73
    // Predicated region
    $region22: #{tpu_custom_call.1} parent=1 // pred_check
      _
    $region23: #{tpu_custom_call.1} parent=1 // pred_check_branch
      %78 = sbr.rel (0) target = $region25
    $region24: #{tpu_custom_call.1} parent=1 // pred_region
      _
    $region25: #{tpu_custom_call.1} parent=1 // pred_fallthru
      _
    // Predicated region
    $region26: #{tpu_custom_call.1} parent=1 // pred_check
      _
    $region27: #{tpu_custom_call.1} parent=1 // pred_check_branch
      %80 = sbr.rel (0) target = $region29
    $region28: #{tpu_custom_call.1} parent=1 // pred_region
      _
    $region29: #{tpu_custom_call.1} parent=1 // pred_fallthru
      _
    %81 = vsyncpa [#allocation3], 1
    %82 = vsyncpa [#allocation5], 1

</llo_original>
